<compile_context>
chip_gen: v7x
topology: tpu7x:2x2x1
jax: 0.10.0
libtpu: 0.0.40
codegen_flags: <defaults>
</compile_context>

<pallas_src>
import jax
import jax.numpy as jnp
from jax.experimental import pallas as pl
from jax.experimental.pallas import tpu as pltpu


def _round_up(x, m):
    return (x + m - 1) // m * m


def _critic_fwd_kernel(state_ref, avg_ref, inv_std_ref,
                       w1_ref, b1_ref, w2_ref, b2_ref,
                       w3_ref, b3_ref, out_ref):
    # Normalized state tile (TB, S); divide replaced by precomputed reciprocal.
    x = (state_ref[...] - avg_ref[...]) * inv_std_ref[...]

    # MLP hot path on the MXU (f32 accumulation; activations are cast to the
    # weight dtype, so bf16 weights give native bf16 MXU passes on v6e/v7x).
    h = jnp.dot(x.astype(w1_ref.dtype), w1_ref[...],
                preferred_element_type=jnp.float32) + b1_ref[...]
    h = jnp.maximum(h, 0.0)
    h = jnp.dot(h.astype(w2_ref.dtype), w2_ref[...],
                preferred_element_type=jnp.float32) + b2_ref[...]
    h = jnp.maximum(h, 0.0)

    # Final Linear(d2 -> 1), with value_re_norm already folded into w3/b3, as
    # elementwise mul + lane reduction so the result is produced as a
    # lane-dense row (unmasked store) rather than a width-1 column.
    # TODO(synk): if profiling ever shows the XLU slot binding, switch to a
    #             (TB, 1) dot + single store instead.
    v = jnp.sum(h * w3_ref[...], axis=-1)     # (TB,)
    v = v[None, :] + b3_ref[0]                # (1, TB); bias = b3*vstd + vavg
    out_ref[...] = v[None]                    # (1, 1, TB)


def prepare_params(params, compute_dtype=jnp.float32):
    """Pad / fold the frozen parameters ONCE (not per forward call).

    compute_dtype: dtype of the matmul weight tiles. Use jnp.bfloat16 on
    v6e/v7x for native MXU throughput (accumulation stays f32 in-kernel).
    """
    (state_avg, state_std, w1, b1, w2, b2, w3, b3, value_avg, value_std) = params
    S, d1 = w1.shape
    d2 = w2.shape[1]
    LANE = 128
    D1_p = _round_up(d1, LANE)
    D2_p = _round_up(d2, LANE)
    f32 = jnp.float32

    avg = state_avg.reshape(1, S).astype(f32)
    inv_std = (1.0 / state_std).reshape(1, S).astype(f32)   # reciprocal once

    w1_p = jnp.zeros((S, D1_p), compute_dtype).at[:, :d1].set(w1.astype(compute_dtype))
    b1_p = jnp.zeros((1, D1_p), f32).at[0, :d1].set(b1.astype(f32))
    w2_p = jnp.zeros((D1_p, D2_p), compute_dtype).at[:d1, :d2].set(w2.astype(compute_dtype))
    b2_p = jnp.zeros((1, D2_p), f32).at[0, :d2].set(b2.astype(f32))

    # Fold value_re_norm into the head:
    #   (h @ w3 + b3) * vstd + vavg  ==  h @ (w3*vstd) + (b3*vstd + vavg)
    w3_p = jnp.zeros((1, D2_p), f32).at[0, :d2].set((w3[:, 0] * value_std[0]).astype(f32))
    b3_f = (b3 * value_std + value_avg).reshape((1,)).astype(f32)

    return (avg, inv_std, w1_p, b1_p, w2_p, b2_p, w3_p, b3_f)


def critic_ppo_forward(state, prepared, *, tb_cap=4096):
    """state: [B, state_dim] f32.  Returns [B] f32 values (value.squeeze(1))."""
    avg, inv_std, w1_p, b1_p, w2_p, b2_p, w3_p, b3_f = prepared
    B, S = state.shape
    D1_p = w1_p.shape[1]
    D2_p = w2_p.shape[1]

    LANE = 128
    # Batch tile: multiple of 128 (lane-dense output rows), capped for VMEM.
    B_lane = _round_up(B, LANE)
    TB = min(tb_cap, B_lane)
    # Prefer >= 2 grid steps when the batch allows it: the "parallel" axis is
    # what shards work across v7x's two TensorCores (harmless on v5e/v6e).
    if B_lane > LANE and -(-B_lane // TB) < 2:
        TB = _round_up(-(-B_lane // 2), LANE)
    B_pad = _round_up(B, TB)
    num_tiles = B_pad // TB

    state_f32 = state.astype(jnp.float32)
    if B_pad != B:
        # Only the batch is padded; the feature axis stays at S (the MXU pads
        # the short contraction dim internally for free).
        state_f32 = jnp.zeros((B_pad, S), jnp.float32).at[:B, :].set(state_f32)

    def const(shape):
        return pl.BlockSpec(shape, lambda i: (0,) * len(shape))

    out = pl.pallas_call(
        _critic_fwd_kernel,
        out_shape=jax.ShapeDtypeStruct((num_tiles, 1, TB), jnp.float32),
        grid=(num_tiles,),
        in_specs=[
            # State: the only streaming operand; tiled over the batch only.
            # TODO(synk): bump to pipeline_mode=pl.Buffered(3) only if a trace
            #             shows exposed DMA at tile boundaries.
            pl.BlockSpec((TB, S), lambda i: (i, 0)),
            const((1, S)), const((1, S)),               # state_avg, 1/state_std (resident)
            const((S, D1_p)), const((1, D1_p)),         # w1, b1 (resident)
            const((D1_p, D2_p)), const((1, D2_p)),      # w2, b2 (resident)
            const((1, D2_p)),                           # w3 * value_std (resident)
            pl.BlockSpec(memory_space=pltpu.MemorySpace.SMEM),  # folded bias scalar
        ],
        out_specs=pl.BlockSpec((1, 1, TB), lambda i: (i, 0, 0)),
        compiler_params=pltpu.CompilerParams(
            dimension_semantics=("parallel",)),
    )(state_f32, avg, inv_std, w1_p, b1_p, w2_p, b2_p, w3_p, b3_f)

    return out.reshape(B_pad)[:B]


def init_params(key, state_dim, dims, action_dim):
    """Mirror the torch module's parameter shapes/init.
    Hidden Linear layers: default uniform init; value head: orthogonal * 0.5,
    bias 1e-6; state/value norm stats at their defaults (zeros / ones)."""
    d1, d2 = dims
    k1, k2, k3 = jax.random.split(key, 3)

    def uniform_linear(k, fan_in, fan_out):
        bound = 1.0 / jnp.sqrt(jnp.float32(fan_in))
        kw, kb = jax.random.split(k)
        w = jax.random.uniform(kw, (fan_in, fan_out), jnp.float32, -bound, bound)
        b = jax.random.uniform(kb, (fan_out,), jnp.float32, -bound, bound)
        return w, b

    w1, b1 = uniform_linear(k1, state_dim, d1)
    w2, b2 = uniform_linear(k2, d1, d2)

    m = jax.random.normal(k3, (d2, 1), jnp.float32)
    q, _ = jnp.linalg.qr(m)
    w3 = 0.5 * q.astype(jnp.float32)
    b3 = jnp.full((1,), 1e-6, jnp.float32)

    state_avg = jnp.zeros((state_dim,), jnp.float32)
    state_std = jnp.ones((state_dim,), jnp.float32)
    value_avg = jnp.zeros((1,), jnp.float32)
    value_std = jnp.ones((1,), jnp.float32)
    return (state_avg, state_std, w1, b1, w2, b2, w3, b3, value_avg, value_std)


def reference_forward(state, params):
    (state_avg, state_std, w1, b1, w2, b2, w3, b3, value_avg, value_std) = params
    x = (state - state_avg) / state_std
    h = jnp.maximum(x @ w1 + b1, 0.0)
    h = jnp.maximum(h @ w2 + b2, 0.0)
    v = h @ w3 + b3                      # (B, 1)
    v = v * value_std + value_avg        # value_re_norm
    return v[:, 0]                       # squeeze(1)


if __name__ == "__main__":
    state_dim, dims, action_dim = 16, [32, 32], 4

    key = jax.random.PRNGKey(0)
    k_params, k_state1, k_state2 = jax.random.split(key, 3)
    params = init_params(k_params, state_dim, dims, action_dim)

    # Pad / fold the frozen weights once (reused across every forward call).
    # On v6e/v7x: prepare_params(params, compute_dtype=jnp.bfloat16).
    prepared = prepare_params(params)

    # Small batch (single grid tile).
    state = jax.random.normal(k_state1, (2, state_dim), jnp.float32)
    values = jax.block_until_ready(critic_ppo_forward(state, prepared))
    expected = reference_forward(state, params)
    assert values.shape == (2,)
    assert jnp.allclose(values, expected, rtol=1e-4, atol=1e-4), (values, expected)

    # Larger batch: exercises batch padding + the >=2-tile (megacore) path.
    state2 = jax.random.normal(k_state2, (260, state_dim), jnp.float32)
    values2 = jax.block_until_ready(critic_ppo_forward(state2, prepared))
    expected2 = reference_forward(state2, params)
    assert values2.shape == (260,)
    assert jnp.allclose(values2, expected2, rtol=1e-4, atol=1e-4)

    print("KERNEL_OK")
</pallas_src>

<mosaic_0001>
module attributes {stable_mosaic.version = 11 : i64} {
  func.func @_critic_fwd_kernel(%arg0: i32, %arg1: memref<128x16xf32, #tpu.memory_space<vmem>>, %arg2: memref<1x16xf32, #tpu.memory_space<vmem>>, %arg3: memref<1x16xf32, #tpu.memory_space<vmem>>, %arg4: memref<16x128xf32, #tpu.memory_space<vmem>>, %arg5: memref<1x128xf32, #tpu.memory_space<vmem>>, %arg6: memref<128x128xf32, #tpu.memory_space<vmem>>, %arg7: memref<1x128xf32, #tpu.memory_space<vmem>>, %arg8: memref<1x128xf32, #tpu.memory_space<vmem>>, %arg9: memref<1xf32, #tpu.memory_space<smem>>, %arg10: memref<1x1x128xf32, #tpu.memory_space<vmem>>) attributes {dimension_semantics = [#tpu.dimension_semantics<parallel>], iteration_bounds = array<i64: 1>, scalar_prefetch = 0 : i64, scratch_operands = 0 : i64, tpu.core_type = #tpu.core_type<tc>, window_params = [{transform_indices = @transform_0, window_bounds = array<i64: 128, 16>}, {pipeline_mode = #tpu.pipeline_mode<synchronous>, transform_indices = @transform_1, window_bounds = array<i64: 1, 16>}, {pipeline_mode = #tpu.pipeline_mode<synchronous>, transform_indices = @transform_2, window_bounds = array<i64: 1, 16>}, {pipeline_mode = #tpu.pipeline_mode<synchronous>, transform_indices = @transform_3, window_bounds = array<i64: 16, 128>}, {pipeline_mode = #tpu.pipeline_mode<synchronous>, transform_indices = @transform_4, window_bounds = array<i64: 1, 128>}, {pipeline_mode = #tpu.pipeline_mode<synchronous>, transform_indices = @transform_5, window_bounds = array<i64: 128, 128>}, {pipeline_mode = #tpu.pipeline_mode<synchronous>, transform_indices = @transform_6, window_bounds = array<i64: 1, 128>}, {pipeline_mode = #tpu.pipeline_mode<synchronous>, transform_indices = @transform_7, window_bounds = array<i64: 1, 128>}, {transform_indices = @transform_8, window_bounds = array<i64: 1>}, {transform_indices = @transform_9, window_bounds = array<i64: 1, 1, 128>}]} {
    %c0 = arith.constant 0 : index
    %c0_0 = arith.constant 0 : index
    %0 = vector.load %arg1[%c0, %c0_0] : memref<128x16xf32, #tpu.memory_space<vmem>>, vector<128x16xf32>
    %c0_1 = arith.constant 0 : index
    %c0_2 = arith.constant 0 : index
    %1 = vector.load %arg2[%c0_1, %c0_2] : memref<1x16xf32, #tpu.memory_space<vmem>>, vector<1x16xf32>
    %2 = vector.broadcast %1 : vector<1x16xf32> to vector<128x16xf32>
    %3 = arith.subf %0, %2 : vector<128x16xf32>
    %c0_3 = arith.constant 0 : index
    %c0_4 = arith.constant 0 : index
    %4 = vector.load %arg3[%c0_3, %c0_4] : memref<1x16xf32, #tpu.memory_space<vmem>>, vector<1x16xf32>
    %5 = vector.broadcast %4 : vector<1x16xf32> to vector<128x16xf32>
    %6 = arith.mulf %3, %5 : vector<128x16xf32>
    %c0_5 = arith.constant 0 : index
    %c0_6 = arith.constant 0 : index
    %7 = vector.load %arg4[%c0_5, %c0_6] : memref<16x128xf32, #tpu.memory_space<vmem>>, vector<16x128xf32>
    %cst = arith.constant dense<0.000000e+00> : vector<128x128xf32>
    %8 = tpu.matmul %6, %7, %cst {dimension_numbers = #tpu.dot_dimension_numbers<[1], [0], [0], [1], [0, 0, 1, 1], [], []>} : vector<128x16xf32>, vector<16x128xf32>, vector<128x128xf32> -> vector<128x128xf32>
    %c0_7 = arith.constant 0 : index
    %c0_8 = arith.constant 0 : index
    %9 = vector.load %arg5[%c0_7, %c0_8] : memref<1x128xf32, #tpu.memory_space<vmem>>, vector<1x128xf32>
    %10 = vector.broadcast %9 : vector<1x128xf32> to vector<128x128xf32>
    %11 = arith.addf %8, %10 : vector<128x128xf32>
    %cst_9 = arith.constant 0.000000e+00 : f32
    %12 = vector.broadcast %cst_9 : f32 to vector<128x128xf32>
    %13 = arith.maximumf %11, %12 : vector<128x128xf32>
    %c0_10 = arith.constant 0 : index
    %c0_11 = arith.constant 0 : index
    %14 = vector.load %arg6[%c0_10, %c0_11] : memref<128x128xf32, #tpu.memory_space<vmem>>, vector<128x128xf32>
    %cst_12 = arith.constant dense<0.000000e+00> : vector<128x128xf32>
    %15 = tpu.matmul %13, %14, %cst_12 {dimension_numbers = #tpu.dot_dimension_numbers<[1], [0], [0], [1], [0, 0, 1, 1], [], []>} : vector<128x128xf32>, vector<128x128xf32>, vector<128x128xf32> -> vector<128x128xf32>
    %c0_13 = arith.constant 0 : index
    %c0_14 = arith.constant 0 : index
    %16 = vector.load %arg7[%c0_13, %c0_14] : memref<1x128xf32, #tpu.memory_space<vmem>>, vector<1x128xf32>
    %17 = vector.broadcast %16 : vector<1x128xf32> to vector<128x128xf32>
    %18 = arith.addf %15, %17 : vector<128x128xf32>
    %cst_15 = arith.constant 0.000000e+00 : f32
    %19 = vector.broadcast %cst_15 : f32 to vector<128x128xf32>
    %20 = arith.maximumf %18, %19 : vector<128x128xf32>
    %c0_16 = arith.constant 0 : index
    %c0_17 = arith.constant 0 : index
    %21 = vector.load %arg8[%c0_16, %c0_17] : memref<1x128xf32, #tpu.memory_space<vmem>>, vector<1x128xf32>
    %22 = vector.broadcast %21 : vector<1x128xf32> to vector<128x128xf32>
    %23 = arith.mulf %20, %22 : vector<128x128xf32>
    %cst_18 = arith.constant dense<0.000000e+00> : vector<128xf32>
    %24 = vector.multi_reduction <add>, %23, %cst_18 [1] : vector<128x128xf32> to vector<128xf32>
    %25 = vector.shape_cast %24 : vector<128xf32> to vector<1x128xf32>
    %c0_19 = arith.constant 0 : index
    %26 = memref.load %arg9[%c0_19] : memref<1xf32, #tpu.memory_space<smem>>
    %27 = vector.broadcast %26 : f32 to vector<1x128xf32>
    %28 = arith.addf %25, %27 : vector<1x128xf32>
    %29 = vector.shape_cast %28 : vector<1x128xf32> to vector<1x1x128xf32>
    %c0_20 = arith.constant 0 : index
    %c0_21 = arith.constant 0 : index
    %c0_22 = arith.constant 0 : index
    %30 = vector.load %arg10[%c0_20, %c0_21, %c0_22] : memref<1x1x128xf32, #tpu.memory_space<vmem>>, vector<1x1x128xf32>
    tpu.vector_store %arg10[%c0_20, %c0_21, %c0_22], %29 {strides = array<i32>} : memref<1x1x128xf32, #tpu.memory_space<vmem>>, vector<1x1x128xf32>,
    return
  }
  func.func @transform_0(%arg0: i32) -> (i32, i32) {
    %c0_i32 = arith.constant 0 : i32
    %c0_i32_0 = arith.constant 0 : i32
    return %arg0, %c0_i32 : i32, i32
  }
  func.func @transform_1(%arg0: i32) -> (i32, i32) {
    %c0_i32 = arith.constant 0 : i32
    %c0_i32_0 = arith.constant 0 : i32
    %c0_i32_1 = arith.constant 0 : i32
    return %c0_i32, %c0_i32_0 : i32, i32
  }
  func.func @transform_2(%arg0: i32) -> (i32, i32) {
    %c0_i32 = arith.constant 0 : i32
    %c0_i32_0 = arith.constant 0 : i32
    %c0_i32_1 = arith.constant 0 : i32
    return %c0_i32, %c0_i32_0 : i32, i32
  }
  func.func @transform_3(%arg0: i32) -> (i32, i32) {
    %c0_i32 = arith.constant 0 : i32
    %c0_i32_0 = arith.constant 0 : i32
    %c0_i32_1 = arith.constant 0 : i32
    return %c0_i32, %c0_i32_0 : i32, i32
  }
  func.func @transform_4(%arg0: i32) -> (i32, i32) {
    %c0_i32 = arith.constant 0 : i32
    %c0_i32_0 = arith.constant 0 : i32
    %c0_i32_1 = arith.constant 0 : i32
    return %c0_i32, %c0_i32_0 : i32, i32
  }
  func.func @transform_5(%arg0: i32) -> (i32, i32) {
    %c0_i32 = arith.constant 0 : i32
    %c0_i32_0 = arith.constant 0 : i32
    %c0_i32_1 = arith.constant 0 : i32
    return %c0_i32, %c0_i32_0 : i32, i32
  }
  func.func @transform_6(%arg0: i32) -> (i32, i32) {
    %c0_i32 = arith.constant 0 : i32
    %c0_i32_0 = arith.constant 0 : i32
    %c0_i32_1 = arith.constant 0 : i32
    return %c0_i32, %c0_i32_0 : i32, i32
  }
  func.func @transform_7(%arg0: i32) -> (i32, i32) {
    %c0_i32 = arith.constant 0 : i32
    %c0_i32_0 = arith.constant 0 : i32
    %c0_i32_1 = arith.constant 0 : i32
    return %c0_i32, %c0_i32_0 : i32, i32
  }
  func.func @transform_8(%arg0: i32) -> i32 {
    %c0_i32 = arith.constant 0 : i32
    %c0_i32_0 = arith.constant 0 : i32
    return %c0_i32 : i32
  }
  func.func @transform_9(%arg0: i32) -> (i32, i32, i32) {
    %c0_i32 = arith.constant 0 : i32
    %c0_i32_0 = arith.constant 0 : i32
    %c0_i32_1 = arith.constant 0 : i32
    return %arg0, %c0_i32, %c0_i32_0 : i32, i32, i32
  }
}

</mosaic_0001>

<llo_original>
// kernel: tpu_custom_call.1
$region0: #{tpu_custom_call.1}
  #allocation0 [shape = 'u32[]', space=smem, size = 0x4, offset = 0x4, fixed_abs, tag = 'smem constant byte address 0x4 - core index']
  #allocation1 [shape = 'u32[144,128]{1,0:T(1,128)}', space=vmem, size = 0x12000, scoped, tag = 'internal scratch']
  #allocation2 [shape = 'f32[1]{0:T(128)S(6)}', space=smem, size = 0x200, scoped, tag = 'scoped memory for tpu_custom_call.1']
  %s0 = inlined_call_operand.vmem [shape: f32[128,16], index: 0, kind: input, shape index: {}]
  %s1 = inlined_call_operand.vmem [shape: f32[1,16], index: 1, kind: input, shape index: {}]
  %s2 = inlined_call_operand.vmem [shape: f32[1,16], index: 2, kind: input, shape index: {}]
  %s3 = inlined_call_operand.vmem [shape: f32[16,128], index: 3, kind: input, shape index: {}]
  %s4 = inlined_call_operand.vmem [shape: f32[1,128], index: 4, kind: input, shape index: {}]
  %s5 = inlined_call_operand.vmem [shape: f32[128,128], index: 5, kind: input, shape index: {}]
  %s6 = inlined_call_operand.vmem [shape: f32[1,128], index: 6, kind: input, shape index: {}]
  %s7 = inlined_call_operand.vmem [shape: f32[1,128], index: 7, kind: input, shape index: {}]
  %s8 = inlined_call_operand.<no memory space> [shape: f32[1], index: 8, kind: input, shape index: {}]
  %s9 = inlined_call_operand.hbm [shape: f32[1,1,128], index: 9, kind: output, shape index: {}]
  %s10 = sld [smem:[#allocation0]]
  $region46: #{tpu_custom_call.1} parent=0
    _
  %s12 = ssub.s32 1, %s10
  %s13 = scalar_select 0, %s12, %s10
  %14 = sst [smem:[#allocation2]] %s8
  $region1: #{tpu_custom_call.1} parent=0
    #allocation3 [shape = 'u8[512]{0}', space=vmem, size = 0x400, scoped, tag = 'output window, operand 0, single buffered']
    #allocation4 [shape = 's32[1]{0}', space=sflag, size = 0x4, scoped, tag = 'scoped memory for tpu_custom_call.1']
    %15 = vsyncpa [#allocation4], 0
    // Predicated region
    $region2: #{tpu_custom_call.1} parent=1 // pred_check
      _
    $region3: #{tpu_custom_call.1} parent=1 // pred_check_branch
      %17 = sbr.rel (0) target = $region5
    $region4: #{tpu_custom_call.1} parent=1 // pred_region
      _
    $region5: #{tpu_custom_call.1} parent=1 // pred_fallthru
      _
    // Predicated region
    $region6: #{tpu_custom_call.1} parent=1 // pred_check
      _
    $region7: #{tpu_custom_call.1} parent=1 // pred_check_branch
      %19 = sbr.rel (0) target = $region9
    $region8: #{tpu_custom_call.1} parent=1 // pred_region
      _
    $region9: #{tpu_custom_call.1} parent=1 // pred_fallthru
      _
    // Predicated region
    $region10: #{tpu_custom_call.1} parent=1 // pred_check
      _
    $region11: #{tpu_custom_call.1} parent=1 // pred_check_branch
      %21 = sbr.rel (0) target = $region13
    $region12: #{tpu_custom_call.1} parent=1 // pred_region
      _
    $region13: #{tpu_custom_call.1} parent=1 // pred_fallthru
      _
    // Predicated region
    $region14: #{tpu_custom_call.1} parent=1 // pred_check
      _
    $region15: #{tpu_custom_call.1} parent=1 // pred_check_branch
      %23 = sbr.rel (0) target = $region17
    $region16: #{tpu_custom_call.1} parent=1 // pred_region
      _
    $region17: #{tpu_custom_call.1} parent=1 // pred_fallthru
      _
    // Predicated region
    $region18: #{tpu_custom_call.1} parent=1 // pred_check
      _
    $region19: #{tpu_custom_call.1} parent=1 // pred_check_branch
      %25 = sbr.rel (0) target = $region21
    $region20: #{tpu_custom_call.1} parent=1 // pred_region
      _
    $region21: #{tpu_custom_call.1} parent=1 // pred_fallthru
      _
    // Predicated region
    $region22: #{tpu_custom_call.1} parent=1 // pred_check
      _
    $region23: #{tpu_custom_call.1} parent=1 // pred_check_branch
      %27 = sbr.rel (0) target = $region25
    $region24: #{tpu_custom_call.1} parent=1 // pred_region
      _
    $region25: #{tpu_custom_call.1} parent=1 // pred_fallthru
      _
    // Predicated region
    $region26: #{tpu_custom_call.1} parent=1 // pred_check
      _
    $region27: #{tpu_custom_call.1} parent=1 // pred_check_branch
      %29 = sbr.rel (0) target = $region29
    $region28: #{tpu_custom_call.1} parent=1 // pred_region
      _
    $region29: #{tpu_custom_call.1} parent=1 // pred_fallthru
      _
    // Predicated region
    $region30: #{tpu_custom_call.1} parent=1 // pred_check
      _
    $region31: #{tpu_custom_call.1} parent=1 // pred_check_branch
      %31 = sbr.rel (0) target = $region33
    $region32: #{tpu_custom_call.1} parent=1 // pred_region
      _
    $region33: #{tpu_custom_call.1} parent=1 // pred_fallthru
      _
    // Predicated region
    $region34: #{tpu_custom_call.1} parent=1 // pred_check
      _
    $region35: #{tpu_custom_call.1} parent=1 // pred_check_branch
      %33 = sbr.rel (0) target = $region37
    $region36: #{tpu_custom_call.1} parent=1 // pred_region
      _
    $region37: #{tpu_custom_call.1} parent=1 // pred_fallthru
      _
    %v34 = vld [vmem:[%s0] sm:$0xff]
    %v35 = vld [vmem:[%s0 + $0x8] sm:$0xff]
    %v36 = vld [vmem:[%s0 + $0x10] sm:$0xff]
    %v37 = vld [vmem:[%s0 + $0x18] sm:$0xff]
    %v38 = vld [vmem:[%s0 + $0x20] sm:$0xff]
    %v39 = vld [vmem:[%s0 + $0x28] sm:$0xff]
    %v40 = vld [vmem:[%s0 + $0x30] sm:$0xff]
    %v41 = vld [vmem:[%s0 + $0x38] sm:$0xff]
    %v42 = vld [vmem:[%s0 + $0x40] sm:$0xff]
    %v43 = vld [vmem:[%s0 + $0x48] sm:$0xff]
    %v44 = vld [vmem:[%s0 + $0x50] sm:$0xff]
    %v45 = vld [vmem:[%s0 + $0x58] sm:$0xff]
    %v46 = vld [vmem:[%s0 + $0x60] sm:$0xff]
    %v47 = vld [vmem:[%s0 + $0x68] sm:$0xff]
    %v48 = vld [vmem:[%s0 + $0x70] sm:$0xff]
    %v49 = vld [vmem:[%s0 + $0x78] sm:$0xff]
    %v50 = vld [vmem:[%s1] sm:$0x1]
    %v52 = vlaneseq
    %v53 = vshrl.u32 %v52, 7
    %v54 = vsub.s32 0, %v53
    %v55 = vrot.slane %v50, %v54
    %v57 = vsub.f32 %v34, %v55
    %v58 = vsub.f32 %v35, %v55
    %v59 = vsub.f32 %v36, %v55
    %v60 = vsub.f32 %v37, %v55
    %v61 = vsub.f32 %v38, %v55
    %v62 = vsub.f32 %v39, %v55
    %v63 = vsub.f32 %v40, %v55
    %v64 = vsub.f32 %v41, %v55
    %v65 = vsub.f32 %v42, %v55
    %v66 = vsub.f32 %v43, %v55
    %v67 = vsub.f32 %v44, %v55
    %v68 = vsub.f32 %v45, %v55
    %v69 = vsub.f32 %v46, %v55
    %v70 = vsub.f32 %v47, %v55
    %v71 = vsub.f32 %v48, %v55
    %v72 = vsub.f32 %v49, %v55
    %v73 = vld [vmem:[%s2] sm:$0x1]
    %v75 = vlaneseq
    %v76 = vshrl.u32 %v75, 7
    %v77 = vsub.s32 0, %v76
    %v78 = vrot.slane %v73, %v77
    %v80 = vmul.f32 %v57, %v78
    %v81 = vmul.f32 %v58, %v78
    %v82 = vmul.f32 %v59, %v78
    %v83 = vmul.f32 %v60, %v78
    %v84 = vmul.f32 %v61, %v78
    %v85 = vmul.f32 %v62, %v78
    %v86 = vmul.f32 %v63, %v78
    %v87 = vmul.f32 %v64, %v78
    %v88 = vmul.f32 %v65, %v78
    %v89 = vmul.f32 %v66, %v78
    %v90 = vmul.f32 %v67, %v78
    %v91 = vmul.f32 %v68, %v78
    %v92 = vmul.f32 %v69, %v78
    %v93 = vmul.f32 %v70, %v78
    %v94 = vmul.f32 %v71, %v78
    %v95 = vmul.f32 %v72, %v78
    %v96 = vld [vmem:[%s3] sm:$0xff]
    %v97 = vld [vmem:[%s3 + $0x8] sm:$0xff]
    %v98 = vld [vmem:[%s4] sm:$0x1]
    %v100 = vlaneseq
    %v101 = vshrl.u32 %v100, 7
    %v102 = vsub.s32 0, %v101
    %v103 = vrot.slane %v98, %v102
    %vm105 = vcmask 130048
    %v107 = vsel %vm105, %v80, 0
    %v110 = vsel %vm105, %v81, 0
    %v113 = vsel %vm105, %v82, 0
    %v116 = vsel %vm105, %v83, 0
    %v119 = vsel %vm105, %v84, 0
    %v122 = vsel %vm105, %v85, 0
    %v125 = vsel %vm105, %v86, 0
    %v128 = vsel %vm105, %v87, 0
    %v131 = vsel %vm105, %v88, 0
    %v134 = vsel %vm105, %v89, 0
    %v137 = vsel %vm105, %v90, 0
    %v140 = vsel %vm105, %v91, 0
    %v143 = vsel %vm105, %v92, 0
    %v146 = vsel %vm105, %v93, 0
    %v149 = vsel %vm105, %v94, 0
    %v152 = vsel %vm105, %v95, 0
    %154 = vmatprep.subr.mxu0 0.0
    %155 = vmatpush1.msra.mxu0 %v96
    %156 = vmatprep.subr.mxu0 0.0
    %157 = vmatpush1.msra.mxu0 %v97
    %158 = vmatprep.subr.mxu0 0.0
    %159 = vmatpush1.msra.mxu0 0.0
    %160 = vmatprep.subr.mxu0 0.0
    %161 = vmatpush1.msra.mxu0 0.0
    %162 = vmatprep.subr.mxu0 0.0
    %163 = vmatpush1.msra.mxu0 0.0
    %164 = vmatprep.subr.mxu0 0.0
    %165 = vmatpush1.msra.mxu0 0.0
    %166 = vmatprep.subr.mxu0 0.0
    %167 = vmatpush1.msra.mxu0 0.0
    %168 = vmatprep.subr.mxu0 0.0
    %169 = vmatpush1.msra.mxu0 0.0
    %170 = vmatprep.subr.mxu0 0.0
    %171 = vmatpush1.msra.mxu0 0.0
    %172 = vmatprep.subr.mxu0 0.0
    %173 = vmatpush1.msra.mxu0 0.0
    %174 = vmatprep.subr.mxu0 0.0
    %175 = vmatpush1.msra.mxu0 0.0
    %176 = vmatprep.subr.mxu0 0.0
    %177 = vmatpush1.msra.mxu0 0.0
    %178 = vmatprep.subr.mxu0 0.0
    %179 = vmatpush1.msra.mxu0 0.0
    %180 = vmatprep.subr.mxu0 0.0
    %181 = vmatpush1.msra.mxu0 0.0
    %182 = vmatprep.subr.mxu0 0.0
    %183 = vmatpush1.msra.mxu0 0.0
    %184 = vmatprep.subr.mxu0 0.0
    %185 = vmatpush1.msra.mxu0 0.0
    %186 = vmatprep.subr.mxu0 0.0
    %187 = vmatpush1.msra.mxu0 0.0
    %188 = vmatprep.subr.mxu0 0.0
    %189 = vmatpush1.msra.mxu0 0.0
    %190 = vmatprep.subr.mxu0 0.0
    %191 = vmatpush1.msra.mxu0 0.0
    %192 = vmatprep.subr.mxu0 0.0
    %193 = vmatpush1.msra.mxu0 0.0
    %194 = vmatprep.subr.mxu0 0.0
    %195 = vmatpush1.msra.mxu0 0.0
    %196 = vmatprep.subr.mxu0 0.0
    %197 = vmatpush1.msra.mxu0 0.0
    %198 = vmatprep.subr.mxu0 0.0
    %199 = vmatpush1.msra.mxu0 0.0
    %200 = vmatprep.subr.mxu0 0.0
    %201 = vmatpush1.msra.mxu0 0.0
    %202 = vmatprep.subr.mxu0 0.0
    %203 = vmatpush1.msra.mxu0 0.0
    %204 = vmatprep.subr.mxu0 0.0
    %205 = vmatpush1.msra.mxu0 0.0
    %206 = vmatprep.subr.mxu0 0.0
    %207 = vmatpush1.msra.mxu0 0.0
    %208 = vmatprep.subr.mxu0 0.0
    %209 = vmatpush1.msra.mxu0 0.0
    %210 = vmatprep.subr.mxu0 0.0
    %211 = vmatpush1.msra.mxu0 0.0
    %212 = vmatprep.subr.mxu0 0.0
    %213 = vmatpush1.msra.mxu0 0.0
    %214 = vmatprep.subr.mxu0 0.0
    %215 = vmatpush1.msra.mxu0 0.0
    %216 = vmatprep.subr.mxu0 0.0
    %217 = vmatpush1.msra.mxu0 0.0
    %218 = vmatprep.mubr.f32.mxu0 0.0
    %219 = vmatmul.mubr.f32.gmra.mrb[0].mxu0 %v107
    %v220 = vpop.f32.mrb[0].mxu0
    %v221 = vadd.f32 %v103, %v220
    %v222 = vpop.f32.mrb[0].mxu0
    %223 = vmatprep.mubr.f32.mxu0 0.0
    %224 = vmatmul.mubr.f32.gmra.mrb[0].mxu0 %v110
    %v225 = vpop.f32.mrb[0].mxu0
    %v226 = vadd.f32 %v103, %v225
    %v227 = vpop.f32.mrb[0].mxu0
    %228 = vmatprep.mubr.f32.mxu0 0.0
    %229 = vmatmul.mubr.f32.gmra.mrb[0].mxu0 %v113
    %v230 = vpop.f32.mrb[0].mxu0
    %v231 = vadd.f32 %v103, %v230
    %v232 = vpop.f32.mrb[0].mxu0
    %233 = vmatprep.mubr.f32.mxu0 0.0
    %234 = vmatmul.mubr.f32.gmra.mrb[0].mxu0 %v116
    %v235 = vpop.f32.mrb[0].mxu0
    %v236 = vadd.f32 %v103, %v235
    %v237 = vpop.f32.mrb[0].mxu0
    %238 = vmatprep.mubr.f32.mxu0 0.0
    %239 = vmatmul.mubr.f32.gmra.mrb[0].mxu0 %v119
    %v240 = vpop.f32.mrb[0].mxu0
    %v241 = vadd.f32 %v103, %v240
    %v242 = vpop.f32.mrb[0].mxu0
    %243 = vmatprep.mubr.f32.mxu0 0.0
    %244 = vmatmul.mubr.f32.gmra.mrb[0].mxu0 %v122
    %v245 = vpop.f32.mrb[0].mxu0
    %v246 = vadd.f32 %v103, %v245
    %v247 = vpop.f32.mrb[0].mxu0
    %248 = vmatprep.mubr.f32.mxu0 0.0
    %249 = vmatmul.mubr.f32.gmra.mrb[0].mxu0 %v125
    %v250 = vpop.f32.mrb[0].mxu0
    %v251 = vadd.f32 %v103, %v250
    %v252 = vpop.f32.mrb[0].mxu0
    %253 = vmatprep.mubr.f32.mxu0 0.0
    %254 = vmatmul.mubr.f32.gmra.mrb[0].mxu0 %v128
    %v255 = vpop.f32.mrb[0].mxu0
    %v256 = vadd.f32 %v103, %v255
    %v257 = vpop.f32.mrb[0].mxu0
    %258 = vmatprep.mubr.f32.mxu0 0.0
    %259 = vmatmul.mubr.f32.gmra.mrb[0].mxu0 %v131
    %v260 = vpop.f32.mrb[0].mxu0
    %v261 = vadd.f32 %v103, %v260
    %v262 = vpop.f32.mrb[0].mxu0
    %263 = vmatprep.mubr.f32.mxu0 0.0
    %264 = vmatmul.mubr.f32.gmra.mrb[0].mxu0 %v134
    %v265 = vpop.f32.mrb[0].mxu0
    %v266 = vadd.f32 %v103, %v265
    %v267 = vpop.f32.mrb[0].mxu0
    %268 = vmatprep.mubr.f32.mxu0 0.0
    %269 = vmatmul.mubr.f32.gmra.mrb[0].mxu0 %v137
    %v270 = vpop.f32.mrb[0].mxu0
    %v271 = vadd.f32 %v103, %v270
    %v272 = vpop.f32.mrb[0].mxu0
    %273 = vmatprep.mubr.f32.mxu0 0.0
    %274 = vmatmul.mubr.f32.gmra.mrb[0].mxu0 %v140
    %v275 = vpop.f32.mrb[0].mxu0
    %v276 = vadd.f32 %v103, %v275
    %v277 = vpop.f32.mrb[0].mxu0
    %278 = vmatprep.mubr.f32.mxu0 0.0
    %279 = vmatmul.mubr.f32.gmra.mrb[0].mxu0 %v143
    %v280 = vpop.f32.mrb[0].mxu0
    %v281 = vadd.f32 %v103, %v280
    %v282 = vpop.f32.mrb[0].mxu0
    %283 = vmatprep.mubr.f32.mxu0 0.0
    %284 = vmatmul.mubr.f32.gmra.mrb[0].mxu0 %v146
    %v285 = vpop.f32.mrb[0].mxu0
    %v286 = vadd.f32 %v103, %v285
    %v287 = vpop.f32.mrb[0].mxu0
    %288 = vmatprep.mubr.f32.mxu0 0.0
    %289 = vmatmul.mubr.f32.gmra.mrb[0].mxu0 %v149
    %v290 = vpop.f32.mrb[0].mxu0
    %v291 = vadd.f32 %v103, %v290
    %v292 = vpop.f32.mrb[0].mxu0
    %293 = vmatprep.mubr.f32.mxu0 0.0
    %294 = vmatmul.mubr.f32.gmra.mrb[0].mxu0 %v152
    %v295 = vpop.f32.mrb[0].mxu0
    %v296 = vadd.f32 %v103, %v295
    %v297 = vpop.f32.mrb[0].mxu0
    %298 = vdwg.mxu0
    %v299 = vmax.f32 %v221, 0.0
    %v300 = vmax.f32 %v226, 0.0
    %v301 = vmax.f32 %v231, 0.0
    %v302 = vmax.f32 %v236, 0.0
    %v303 = vmax.f32 %v241, 0.0
    %v304 = vmax.f32 %v246, 0.0
    %v305 = vmax.f32 %v251, 0.0
    %v306 = vmax.f32 %v256, 0.0
    %v307 = vmax.f32 %v261, 0.0
    %v308 = vmax.f32 %v266, 0.0
    %v309 = vmax.f32 %v271, 0.0
    %v310 = vmax.f32 %v276, 0.0
    %v311 = vmax.f32 %v281, 0.0
    %v312 = vmax.f32 %v286, 0.0
    %v313 = vmax.f32 %v291, 0.0
    %v314 = vmax.f32 %v296, 0.0
    %v315 = vld [vmem:[%s5] sm:$0xff]
    %v316 = vld [vmem:[%s5 + $0x8] sm:$0xff]
    %v317 = vld [vmem:[%s5 + $0x10] sm:$0xff]
    %v318 = vld [vmem:[%s5 + $0x18] sm:$0xff]
    %v319 = vld [vmem:[%s5 + $0x20] sm:$0xff]
    %v320 = vld [vmem:[%s5 + $0x28] sm:$0xff]
    %v321 = vld [vmem:[%s5 + $0x30] sm:$0xff]
    %v322 = vld [vmem:[%s5 + $0x38] sm:$0xff]
    %v323 = vld [vmem:[%s5 + $0x40] sm:$0xff]
    %v324 = vld [vmem:[%s5 + $0x48] sm:$0xff]
    %v325 = vld [vmem:[%s5 + $0x50] sm:$0xff]
    %v326 = vld [vmem:[%s5 + $0x58] sm:$0xff]
    %v327 = vld [vmem:[%s5 + $0x60] sm:$0xff]
    %v328 = vld [vmem:[%s5 + $0x68] sm:$0xff]
    %v329 = vld [vmem:[%s5 + $0x70] sm:$0xff]
    %v330 = vld [vmem:[%s5 + $0x78] sm:$0xff]
    %v331 = vld [vmem:[%s6] sm:$0x1]
    %v333 = vlaneseq
    %v334 = vshrl.u32 %v333, 7
    %v335 = vsub.s32 0, %v334
    %v336 = vrot.slane %v331, %v335
    %338 = vmatprep.subr.mxu0 0.0
    %339 = vmatpush1.msra.mxu0 %v315
    %340 = vmatprep.subr.mxu0 0.0
    %341 = vmatpush1.msra.mxu0 %v316
    %342 = vmatprep.subr.mxu0 0.0
    %343 = vmatpush1.msra.mxu0 %v317
    %344 = vmatprep.subr.mxu0 0.0
    %345 = vmatpush1.msra.mxu0 %v318
    %346 = vmatprep.subr.mxu0 0.0
    %347 = vmatpush1.msra.mxu0 %v319
    %348 = vmatprep.subr.mxu0 0.0
    %349 = vmatpush1.msra.mxu0 %v320
    %350 = vmatprep.subr.mxu0 0.0
    %351 = vmatpush1.msra.mxu0 %v321
    %352 = vmatprep.subr.mxu0 0.0
    %353 = vmatpush1.msra.mxu0 %v322
    %354 = vmatprep.subr.mxu0 0.0
    %355 = vmatpush1.msra.mxu0 %v323
    %356 = vmatprep.subr.mxu0 0.0
    %357 = vmatpush1.msra.mxu0 %v324
    %358 = vmatprep.subr.mxu0 0.0
    %359 = vmatpush1.msra.mxu0 %v325
    %360 = vmatprep.subr.mxu0 0.0
    %361 = vmatpush1.msra.mxu0 %v326
    %362 = vmatprep.subr.mxu0 0.0
    %363 = vmatpush1.msra.mxu0 %v327
    %364 = vmatprep.subr.mxu0 0.0
    %365 = vmatpush1.msra.mxu0 %v328
    %366 = vmatprep.subr.mxu0 0.0
    %367 = vmatpush1.msra.mxu0 %v329
    %368 = vmatprep.subr.mxu0 0.0
    %369 = vmatpush1.msra.mxu0 %v330
    %370 = vmatprep.subr.mxu0 0.0
    %371 = vmatpush1.msra.mxu0 0.0
    %372 = vmatprep.subr.mxu0 0.0
    %373 = vmatpush1.msra.mxu0 0.0
    %374 = vmatprep.subr.mxu0 0.0
    %375 = vmatpush1.msra.mxu0 0.0
    %376 = vmatprep.subr.mxu0 0.0
    %377 = vmatpush1.msra.mxu0 0.0
    %378 = vmatprep.subr.mxu0 0.0
    %379 = vmatpush1.msra.mxu0 0.0
    %380 = vmatprep.subr.mxu0 0.0
    %381 = vmatpush1.msra.mxu0 0.0
    %382 = vmatprep.subr.mxu0 0.0
    %383 = vmatpush1.msra.mxu0 0.0
    %384 = vmatprep.subr.mxu0 0.0
    %385 = vmatpush1.msra.mxu0 0.0
    %386 = vmatprep.subr.mxu0 0.0
    %387 = vmatpush1.msra.mxu0 0.0
    %388 = vmatprep.subr.mxu0 0.0
    %389 = vmatpush1.msra.mxu0 0.0
    %390 = vmatprep.subr.mxu0 0.0
    %391 = vmatpush1.msra.mxu0 0.0
    %392 = vmatprep.subr.mxu0 0.0
    %393 = vmatpush1.msra.mxu0 0.0
    %394 = vmatprep.subr.mxu0 0.0
    %395 = vmatpush1.msra.mxu0 0.0
    %396 = vmatprep.subr.mxu0 0.0
    %397 = vmatpush1.msra.mxu0 0.0
    %398 = vmatprep.subr.mxu0 0.0
    %399 = vmatpush1.msra.mxu0 0.0
    %400 = vmatprep.subr.mxu0 0.0
    %401 = vmatpush1.msra.mxu0 0.0
    %402 = vmatprep.mubr.f32.mxu0 0.0
    %403 = vmatmul.mubr.f32.gmra.mrb[0].mxu0 %v299
    %v404 = vpop.f32.mrb[0].mxu0
    %v405 = vadd.f32 %v336, %v404
    %v406 = vpop.f32.mrb[0].mxu0
    %407 = vmatprep.mubr.f32.mxu0 0.0
    %408 = vmatmul.mubr.f32.gmra.mrb[0].mxu0 %v300
    %v409 = vpop.f32.mrb[0].mxu0
    %v410 = vadd.f32 %v336, %v409
    %v411 = vpop.f32.mrb[0].mxu0
    %412 = vmatprep.mubr.f32.mxu0 0.0
    %413 = vmatmul.mubr.f32.gmra.mrb[0].mxu0 %v301
    %v414 = vpop.f32.mrb[0].mxu0
    %v415 = vadd.f32 %v336, %v414
    %v416 = vpop.f32.mrb[0].mxu0
    %417 = vmatprep.mubr.f32.mxu0 0.0
    %418 = vmatmul.mubr.f32.gmra.mrb[0].mxu0 %v302
    %v419 = vpop.f32.mrb[0].mxu0
    %v420 = vadd.f32 %v336, %v419
    %v421 = vpop.f32.mrb[0].mxu0
    %422 = vmatprep.mubr.f32.mxu0 0.0
    %423 = vmatmul.mubr.f32.gmra.mrb[0].mxu0 %v303
    %v424 = vpop.f32.mrb[0].mxu0
    %v425 = vadd.f32 %v336, %v424
    %v426 = vpop.f32.mrb[0].mxu0
    %427 = vmatprep.mubr.f32.mxu0 0.0
    %428 = vmatmul.mubr.f32.gmra.mrb[0].mxu0 %v304
    %v429 = vpop.f32.mrb[0].mxu0
    %v430 = vadd.f32 %v336, %v429
    %v431 = vpop.f32.mrb[0].mxu0
    %432 = vmatprep.mubr.f32.mxu0 0.0
    %433 = vmatmul.mubr.f32.gmra.mrb[0].mxu0 %v305
    %v434 = vpop.f32.mrb[0].mxu0
    %v435 = vadd.f32 %v336, %v434
    %v436 = vpop.f32.mrb[0].mxu0
    %437 = vmatprep.mubr.f32.mxu0 0.0
    %438 = vmatmul.mubr.f32.gmra.mrb[0].mxu0 %v306
    %v439 = vpop.f32.mrb[0].mxu0
    %v440 = vadd.f32 %v336, %v439
    %v441 = vpop.f32.mrb[0].mxu0
    %442 = vmatprep.mubr.f32.mxu0 0.0
    %443 = vmatmul.mubr.f32.gmra.mrb[0].mxu0 %v307
    %v444 = vpop.f32.mrb[0].mxu0
    %v445 = vadd.f32 %v336, %v444
    %v446 = vpop.f32.mrb[0].mxu0
    %447 = vmatprep.mubr.f32.mxu0 0.0
    %448 = vmatmul.mubr.f32.gmra.mrb[0].mxu0 %v308
    %v449 = vpop.f32.mrb[0].mxu0
    %v450 = vadd.f32 %v336, %v449
    %v451 = vpop.f32.mrb[0].mxu0
    %452 = vmatprep.mubr.f32.mxu0 0.0
    %453 = vmatmul.mubr.f32.gmra.mrb[0].mxu0 %v309
    %v454 = vpop.f32.mrb[0].mxu0
    %v455 = vadd.f32 %v336, %v454
    %v456 = vpop.f32.mrb[0].mxu0
    %457 = vmatprep.mubr.f32.mxu0 0.0
    %458 = vmatmul.mubr.f32.gmra.mrb[0].mxu0 %v310
    %v459 = vpop.f32.mrb[0].mxu0
    %v460 = vadd.f32 %v336, %v459
    %v461 = vpop.f32.mrb[0].mxu0
    %462 = vmatprep.mubr.f32.mxu0 0.0
    %463 = vmatmul.mubr.f32.gmra.mrb[0].mxu0 %v311
    %v464 = vpop.f32.mrb[0].mxu0
    %v465 = vadd.f32 %v336, %v464
    %v466 = vpop.f32.mrb[0].mxu0
    %467 = vmatprep.mubr.f32.mxu0 0.0
    %468 = vmatmul.mubr.f32.gmra.mrb[0].mxu0 %v312
    %v469 = vpop.f32.mrb[0].mxu0
    %v470 = vadd.f32 %v336, %v469
    %v471 = vpop.f32.mrb[0].mxu0
    %472 = vmatprep.mubr.f32.mxu0 0.0
    %473 = vmatmul.mubr.f32.gmra.mrb[0].mxu0 %v313
    %v474 = vpop.f32.mrb[0].mxu0
    %v475 = vadd.f32 %v336, %v474
    %v476 = vpop.f32.mrb[0].mxu0
    %477 = vmatprep.mubr.f32.mxu0 0.0
    %478 = vmatmul.mubr.f32.gmra.mrb[0].mxu0 %v314
    %v479 = vpop.f32.mrb[0].mxu0
    %v480 = vadd.f32 %v336, %v479
    %v481 = vpop.f32.mrb[0].mxu0
    %482 = vdwg.mxu0
    %v483 = vmax.f32 %v405, 0.0
    %v484 = vmax.f32 %v410, 0.0
    %v485 = vmax.f32 %v415, 0.0
    %v486 = vmax.f32 %v420, 0.0
    %v487 = vmax.f32 %v425, 0.0
    %v488 = vmax.f32 %v430, 0.0
    %v489 = vmax.f32 %v435, 0.0
    %v490 = vmax.f32 %v440, 0.0
    %v491 = vmax.f32 %v445, 0.0
    %v492 = vmax.f32 %v450, 0.0
    %v493 = vmax.f32 %v455, 0.0
    %v494 = vmax.f32 %v460, 0.0
    %v495 = vmax.f32 %v465, 0.0
    %v496 = vmax.f32 %v470, 0.0
    %v497 = vmax.f32 %v475, 0.0
    %v498 = vmax.f32 %v480, 0.0
    %v499 = vld [vmem:[%s7] sm:$0x1]
    %v501 = vlaneseq
    %v502 = vshrl.u32 %v501, 7
    %v503 = vsub.s32 0, %v502
    %v504 = vrot.slane %v499, %v503
    %v506 = vmul.f32 %v483, %v504
    %v507 = vmul.f32 %v484, %v504
    %v508 = vmul.f32 %v485, %v504
    %v509 = vmul.f32 %v486, %v504
    %v510 = vmul.f32 %v487, %v504
    %v511 = vmul.f32 %v488, %v504
    %v512 = vmul.f32 %v489, %v504
    %v513 = vmul.f32 %v490, %v504
    %v514 = vmul.f32 %v491, %v504
    %v515 = vmul.f32 %v492, %v504
    %v516 = vmul.f32 %v493, %v504
    %v517 = vmul.f32 %v494, %v504
    %v518 = vmul.f32 %v495, %v504
    %v519 = vmul.f32 %v496, %v504
    %v520 = vmul.f32 %v497, %v504
    %v521 = vmul.f32 %v498, %v504
    %522 = vadd.xlane.f32.xlu0 %v506
    %v523 = vpop.xlane.xlu0 %522
    %524 = vadd.xlane.f32.xlu0 %v507
    %v525 = vpop.xlane.xlu0 %524
    %526 = vadd.xlane.f32.xlu0 %v508
    %v527 = vpop.xlane.xlu0 %526
    %528 = vadd.xlane.f32.xlu0 %v509
    %v529 = vpop.xlane.xlu0 %528
    %530 = vadd.xlane.f32.xlu0 %v510
    %v531 = vpop.xlane.xlu0 %530
    %532 = vadd.xlane.f32.xlu0 %v511
    %v533 = vpop.xlane.xlu0 %532
    %534 = vadd.xlane.f32.xlu0 %v512
    %v535 = vpop.xlane.xlu0 %534
    %536 = vadd.xlane.f32.xlu0 %v513
    %v537 = vpop.xlane.xlu0 %536
    %538 = vadd.xlane.f32.xlu0 %v514
    %v539 = vpop.xlane.xlu0 %538
    %540 = vadd.xlane.f32.xlu0 %v515
    %v541 = vpop.xlane.xlu0 %540
    %542 = vadd.xlane.f32.xlu0 %v516
    %v543 = vpop.xlane.xlu0 %542
    %544 = vadd.xlane.f32.xlu0 %v517
    %v545 = vpop.xlane.xlu0 %544
    %546 = vadd.xlane.f32.xlu0 %v518
    %v547 = vpop.xlane.xlu0 %546
    %548 = vadd.xlane.f32.xlu0 %v519
    %v549 = vpop.xlane.xlu0 %548
    %550 = vadd.xlane.f32.xlu0 %v520
    %v551 = vpop.xlane.xlu0 %550
    %552 = vadd.xlane.f32.xlu0 %v521
    %v553 = vpop.xlane.xlu0 %552
    %s554 = sld [smem:[#allocation2]]
    %v555 = vstv %s554
    %v556 = vadd.f32 %v523, %v555
    %v557 = vadd.f32 %v525, %v555
    %v558 = vadd.f32 %v527, %v555
    %v559 = vadd.f32 %v529, %v555
    %v560 = vadd.f32 %v531, %v555
    %v561 = vadd.f32 %v533, %v555
    %v562 = vadd.f32 %v535, %v555
    %v563 = vadd.f32 %v537, %v555
    %v564 = vadd.f32 %v539, %v555
    %v565 = vadd.f32 %v541, %v555
    %v566 = vadd.f32 %v543, %v555
    %v567 = vadd.f32 %v545, %v555
    %v568 = vadd.f32 %v547, %v555
    %v569 = vadd.f32 %v549, %v555
    %v570 = vadd.f32 %v551, %v555
    %v571 = vadd.f32 %v553, %v555
    %v588 = vlaneseq
    %v589 = vand.u32 %v588, 127
    %v590 = vlaneseq
    %v591 = vshrl.u32 %v590, 7
    %v592 = vsub.s32 %v589, %v591
    %v593 = vrot.slane %v556, %v592
    %v594 = vadd.s32 %v589, 4294967288
    %v595 = vlaneseq
    %v596 = vshrl.u32 %v595, 7
    %v597 = vsub.s32 %v594, %v596
    %v598 = vrot.slane %v557, %v597
    %vm599 = vcmask 130112
    %v600 = vsel %vm599, %v598, %v593
    %v601 = vadd.s32 %v589, 4294967280
    %v602 = vlaneseq
    %v603 = vshrl.u32 %v602, 7
    %v604 = vsub.s32 %v601, %v603
    %v605 = vrot.slane %v558, %v604
    %vm606 = vcmask 195712
    %v607 = vsel %vm606, %v605, %v600
    %v608 = vadd.s32 %v589, 4294967272
    %v609 = vlaneseq
    %v610 = vshrl.u32 %v609, 7
    %v611 = vsub.s32 %v608, %v610
    %v612 = vrot.slane %v559, %v611
    %vm613 = vcmask 261312
    %v614 = vsel %vm613, %v612, %v607
    %v615 = vadd.s32 %v589, 4294967264
    %v616 = vlaneseq
    %v617 = vshrl.u32 %v616, 7
    %v618 = vsub.s32 %v615, %v617
    %v619 = vrot.slane %v560, %v618
    %vm620 = vcmask 326912
    %v621 = vsel %vm620, %v619, %v614
    %v622 = vadd.s32 %v589, 4294967256
    %v623 = vlaneseq
    %v624 = vshrl.u32 %v623, 7
    %v625 = vsub.s32 %v622, %v624
    %v626 = vrot.slane %v561, %v625
    %vm627 = vcmask 392512
    %v628 = vsel %vm627, %v626, %v621
    %v629 = vadd.s32 %v589, 4294967248
    %v630 = vlaneseq
    %v631 = vshrl.u32 %v630, 7
    %v632 = vsub.s32 %v629, %v631
    %v633 = vrot.slane %v562, %v632
    %vm634 = vcmask 458112
    %v635 = vsel %vm634, %v633, %v628
    %v636 = vadd.s32 %v589, 4294967240
    %v637 = vlaneseq
    %v638 = vshrl.u32 %v637, 7
    %v639 = vsub.s32 %v636, %v638
    %v640 = vrot.slane %v563, %v639
    %vm641 = vcmask 523712
    %v642 = vsel %vm641, %v640, %v635
    %v643 = vadd.s32 %v589, 4294967232
    %v644 = vlaneseq
    %v645 = vshrl.u32 %v644, 7
    %v646 = vsub.s32 %v643, %v645
    %v647 = vrot.slane %v564, %v646
    %vm648 = vcmask 589312
    %v649 = vsel %vm648, %v647, %v642
    %v650 = vadd.s32 %v589, 4294967224
    %v651 = vlaneseq
    %v652 = vshrl.u32 %v651, 7
    %v653 = vsub.s32 %v650, %v652
    %v654 = vrot.slane %v565, %v653
    %vm655 = vcmask 654912
    %v656 = vsel %vm655, %v654, %v649
    %v657 = vadd.s32 %v589, 4294967216
    %v658 = vlaneseq
    %v659 = vshrl.u32 %v658, 7
    %v660 = vsub.s32 %v657, %v659
    %v661 = vrot.slane %v566, %v660
    %vm662 = vcmask 720512
    %v663 = vsel %vm662, %v661, %v656
    %v664 = vadd.s32 %v589, 4294967208
    %v665 = vlaneseq
    %v666 = vshrl.u32 %v665, 7
    %v667 = vsub.s32 %v664, %v666
    %v668 = vrot.slane %v567, %v667
    %vm669 = vcmask 786112
    %v670 = vsel %vm669, %v668, %v663
    %v671 = vadd.s32 %v589, 4294967200
    %v672 = vlaneseq
    %v673 = vshrl.u32 %v672, 7
    %v674 = vsub.s32 %v671, %v673
    %v675 = vrot.slane %v568, %v674
    %vm676 = vcmask 851712
    %v677 = vsel %vm676, %v675, %v670
    %v678 = vadd.s32 %v589, 4294967192
    %v679 = vlaneseq
    %v680 = vshrl.u32 %v679, 7
    %v681 = vsub.s32 %v678, %v680
    %v682 = vrot.slane %v569, %v681
    %vm683 = vcmask 917312
    %v684 = vsel %vm683, %v682, %v677
    %v685 = vadd.s32 %v589, 4294967184
    %v686 = vlaneseq
    %v687 = vshrl.u32 %v686, 7
    %v688 = vsub.s32 %v685, %v687
    %v689 = vrot.slane %v570, %v688
    %vm690 = vcmask 982912
    %v691 = vsel %vm690, %v689, %v684
    %v692 = vadd.s32 %v589, 4294967176
    %v693 = vlaneseq
    %v694 = vshrl.u32 %v693, 7
    %v695 = vsub.s32 %v692, %v694
    %v696 = vrot.slane %v571, %v695
    %vm697 = vcmask 1048512
    %v698 = vsel %vm697, %v696, %v691
    %700 = vst [vmem:[#allocation3] sm:$0x1] %v698
    // Predicated region
    $region38: #{tpu_custom_call.1} parent=1 // pred_check
      _
    $region39: #{tpu_custom_call.1} parent=1 // pred_check_branch
      %702 = sbr.rel (0) target = $region41
    $region40: #{tpu_custom_call.1} parent=1 // pred_region
      %s704 = ssub.s32 16, 16
      %705 = vsyncadd [#allocation4], %s704
      %s707 = sshll.u32 [#allocation3], 4
      %s708 = int_to_ptr.vmem [resolvable:$true] %s707
      %710 = dma.vmem_to_hbm [thread:$0]  %s708, 16, %s9, [#allocation4]
    $region41: #{tpu_custom_call.1} parent=1 // pred_fallthru
      _
    // Predicated region
    $region42: #{tpu_custom_call.1} parent=1 // pred_check
      _
    $region43: #{tpu_custom_call.1} parent=1 // pred_check_branch
      %712 = sbr.rel (0) target = $region45
    $region44: #{tpu_custom_call.1} parent=1 // pred_region
      %713 = dma.done [#allocation4], 16
    $region45: #{tpu_custom_call.1} parent=1 // pred_fallthru
      _
    %714 = vsyncpa [#allocation4], 1

</llo_original>
